<compile_context>
chip_gen: v7x
topology: tpu7x:2x2x1
jax: 0.10.0
libtpu: 0.0.40
codegen_flags: <defaults>
</compile_context>

<pallas_src>
import functools

import jax
import jax.numpy as jnp
from jax.experimental import pallas as pl
from jax.experimental.pallas import tpu as pltpu

LANE = 128      # lane width (batch axis)
SUBLANE = 8     # sublane width (hidden axis)


def mlp_kernel(xT_ref, params_ref, b2_ref, oT_ref):
    """out^T = sum_h relu(w1[h]*x^T + b1[h]) * w2[h] + b2   (batch on lanes, hidden on sublanes).

    Specialized for n_features == 1 and n_out == 1: layer 1 is an outer product
    (VPU broadcast multiply), layer 2 is a sublane reduce (XLU). Zero-padded hidden
    rows are inert through ReLU and the sum; padded batch lanes are sliced off in
    the wrapper.
    """
    xT = xT_ref[...]                                    # (1, TILE)   batch on lane axis
    p = params_ref[...]                                 # (H_pad, 3)  packed params
    w1 = p[:, 0:1]                                      # (H_pad, 1)
    b1 = p[:, 1:2]                                      # (H_pad, 1)
    w2 = p[:, 2:3]                                      # (H_pad, 1)
    h = jnp.maximum(w1 * xT + b1, 0.0)                  # (H_pad, TILE)  VPU only
    yT = jnp.sum(h * w2, axis=0, keepdims=True)         # (1, TILE)      XLU sublane reduce
    oT_ref[...] = yT + b2_ref[0, 0]                     # scalar bias from SMEM, lane-dense store


def prepare_params(w1, b1, w2, b2):
    """One-time packing of parameters into kernel layout (amortized across calls).

    w1: (1, n_hidden)   (stored as (in, out) = transpose of PyTorch's weight)
    b1: (n_hidden,)
    w2: (n_hidden, 1)
    b2: (1,)
    Returns:
      packed:  (H_pad, 3) f32 — columns are [w1, b1, w2], zero-padded on hidden axis.
      b2_smem: (1, 1) f32 — output bias for SMEM.
    """
    F, H = w1.shape
    H2, O = w2.shape
    assert F == 1 and O == 1 and H == H2, "kernel specialized for 1-in / 1-out regression Net"
    H_pad = ((H + SUBLANE - 1) // SUBLANE) * SUBLANE
    packed = jnp.zeros((H_pad, 3), jnp.float32)
    packed = packed.at[:H, 0].set(w1[0, :].astype(jnp.float32))
    packed = packed.at[:H, 1].set(b1.astype(jnp.float32))
    packed = packed.at[:H, 2].set(w2[:, 0].astype(jnp.float32))
    b2_smem = b2.reshape(1, 1).astype(jnp.float32)
    return packed, b2_smem


@jax.jit
def net_forward(x, packed_params, b2_smem):
    """Pallas equivalent of Net.forward. x: (B, 1) f32 -> (B, 1) f32."""
    B, F = x.shape
    assert F == 1, "kernel specialized for n_features == 1"
    H_pad = packed_params.shape[0]

    B_pad = ((B + LANE - 1) // LANE) * LANE
    if B_pad >= 4096:
        # Large batch: tile the lane axis so the (parallel) grid can feed both
        # TensorCores on v7x. 2048-lane tiles keep h at ~(H_pad * 8 KiB), far under
        # the scoped-VMEM limit on every generation (16/32/32 MiB).
        TILE = 2048
        B_pad = ((B_pad + TILE - 1) // TILE) * TILE
    else:
        # Tiny batch (the regression case, B=100 -> B_pad=128): single grid step.
        TILE = B_pad
    grid = (B_pad // TILE,)

    # Single Pad HLO (batch -> lane axis); padding is sliced off below.
    xT = jnp.pad(x[:, 0], (0, B_pad - B)).reshape(1, B_pad)

    yT = pl.pallas_call(
        mlp_kernel,
        out_shape=jax.ShapeDtypeStruct((1, B_pad), jnp.float32),
        grid=grid,
        in_specs=[
            pl.BlockSpec((1, TILE), lambda i: (0, i)),        # xT: batch lane tiles
            pl.BlockSpec((H_pad, 3), lambda i: (0, 0)),       # packed params: resident
            pl.BlockSpec(memory_space=pltpu.SMEM),            # b2 scalar
        ],
        out_specs=pl.BlockSpec((1, TILE), lambda i: (0, i)),
        compiler_params=pltpu.CompilerParams(
            dimension_semantics=("parallel",)),
    )(xT, packed_params, b2_smem)

    # Restore the (B, 1) layout required by Net.forward (only remaining post-kernel op).
    return yT[0, :B].reshape(B, 1)


def init_params(key, n_features, n_hidden, n_out):
    """Deterministic init mimicking nn.Linear default (uniform +-1/sqrt(fan_in))."""
    k1, k2, k3, k4 = jax.random.split(key, 4)
    bound1 = 1.0 / jnp.sqrt(jnp.float32(n_features))
    bound2 = 1.0 / jnp.sqrt(jnp.float32(n_hidden))
    # Stored as (in, out) = transpose of PyTorch's (out, in) weight.
    w1 = jax.random.uniform(k1, (n_features, n_hidden), jnp.float32, -bound1, bound1)
    b1 = jax.random.uniform(k2, (n_hidden,), jnp.float32, -bound1, bound1)
    w2 = jax.random.uniform(k3, (n_hidden, n_out), jnp.float32, -bound2, bound2)
    b2 = jax.random.uniform(k4, (n_out,), jnp.float32, -bound2, bound2)
    return w1, b1, w2, b2


if __name__ == "__main__":
    # Matches the reference script: x = unsqueeze(linspace(-1, 1, 100), 1) -> (100, 1)
    n_features, n_hidden, n_out = 1, 32, 1
    batch = 100

    key = jax.random.PRNGKey(0)
    w1, b1, w2, b2 = init_params(key, n_features, n_hidden, n_out)

    # One-time parameter packing (reused across calls; packing cost amortizes to zero).
    packed_params, b2_smem = prepare_params(w1, b1, w2, b2)

    x = jnp.linspace(-1.0, 1.0, batch, dtype=jnp.float32).reshape(batch, 1)

    out = jax.block_until_ready(net_forward(x, packed_params, b2_smem))

    # Pure-JAX reference check of the same math.
    ref = jnp.maximum(x @ w1 + b1[None, :], 0.0) @ w2 + b2[None, :]
    assert out.shape == (batch, n_out)
    assert jnp.allclose(out, ref, atol=1e-5, rtol=1e-5)

    print("KERNEL_OK")
</pallas_src>

<mosaic_0001>
module attributes {stable_mosaic.version = 11 : i64} {
  func.func @mlp_kernel(%arg0: i32, %arg1: memref<1x128xf32, #tpu.memory_space<vmem>>, %arg2: memref<32x3xf32, #tpu.memory_space<vmem>>, %arg3: memref<1x1xf32, #tpu.memory_space<smem>>, %arg4: memref<1x128xf32, #tpu.memory_space<vmem>>) attributes {dimension_semantics = [#tpu.dimension_semantics<parallel>], iteration_bounds = array<i64: 1>, scalar_prefetch = 0 : i64, scratch_operands = 0 : i64, tpu.core_type = #tpu.core_type<tc>, window_params = [{transform_indices = @transform_0, window_bounds = array<i64: 1, 128>}, {pipeline_mode = #tpu.pipeline_mode<synchronous>, transform_indices = @transform_1, window_bounds = array<i64: 32, 3>}, {transform_indices = @transform_2, window_bounds = array<i64: 1, 1>}, {transform_indices = @transform_3, window_bounds = array<i64: 1, 128>}]} {
    %c0 = arith.constant 0 : index
    %c0_0 = arith.constant 0 : index
    %0 = vector.load %arg1[%c0, %c0_0] : memref<1x128xf32, #tpu.memory_space<vmem>>, vector<1x128xf32>
    %c0_1 = arith.constant 0 : index
    %c0_2 = arith.constant 0 : index
    %1 = vector.load %arg2[%c0_1, %c0_2] : memref<32x3xf32, #tpu.memory_space<vmem>>, vector<32x3xf32>
    %2 = vector.extract_strided_slice %1 {offsets = [0, 0], sizes = [32, 1], strides = [1, 1]} : vector<32x3xf32> to vector<32x1xf32>
    %3 = vector.extract_strided_slice %1 {offsets = [0, 1], sizes = [32, 1], strides = [1, 1]} : vector<32x3xf32> to vector<32x1xf32>
    %4 = vector.extract_strided_slice %1 {offsets = [0, 2], sizes = [32, 1], strides = [1, 1]} : vector<32x3xf32> to vector<32x1xf32>
    %5 = vector.broadcast %2 : vector<32x1xf32> to vector<32x128xf32>
    %6 = vector.broadcast %0 : vector<1x128xf32> to vector<32x128xf32>
    %7 = arith.mulf %5, %6 : vector<32x128xf32>
    %8 = vector.broadcast %3 : vector<32x1xf32> to vector<32x128xf32>
    %9 = arith.addf %7, %8 : vector<32x128xf32>
    %cst = arith.constant 0.000000e+00 : f32
    %10 = vector.broadcast %cst : f32 to vector<32x128xf32>
    %11 = arith.maximumf %9, %10 : vector<32x128xf32>
    %12 = vector.broadcast %4 : vector<32x1xf32> to vector<32x128xf32>
    %13 = arith.mulf %11, %12 : vector<32x128xf32>
    %cst_3 = arith.constant dense<0.000000e+00> : vector<128xf32>
    %14 = vector.multi_reduction <add>, %13, %cst_3 [0] : vector<32x128xf32> to vector<128xf32>
    %15 = vector.shape_cast %14 : vector<128xf32> to vector<1x128xf32>
    %c0_4 = arith.constant 0 : index
    %c0_5 = arith.constant 0 : index
    %16 = memref.load %arg3[%c0_4, %c0_5] : memref<1x1xf32, #tpu.memory_space<smem>>
    %17 = vector.broadcast %16 : f32 to vector<1x128xf32>
    %18 = arith.addf %15, %17 : vector<1x128xf32>
    %c0_6 = arith.constant 0 : index
    %c0_7 = arith.constant 0 : index
    %19 = vector.load %arg4[%c0_6, %c0_7] : memref<1x128xf32, #tpu.memory_space<vmem>>, vector<1x128xf32>
    tpu.vector_store %arg4[%c0_6, %c0_7], %18 {strides = array<i32>} : memref<1x128xf32, #tpu.memory_space<vmem>>, vector<1x128xf32>,
    return
  }
  func.func @transform_0(%arg0: i32) -> (i32, i32) {
    %c0_i32 = arith.constant 0 : i32
    %c0_i32_0 = arith.constant 0 : i32
    return %c0_i32, %arg0 : i32, i32
  }
  func.func @transform_1(%arg0: i32) -> (i32, i32) {
    %c0_i32 = arith.constant 0 : i32
    %c0_i32_0 = arith.constant 0 : i32
    %c0_i32_1 = arith.constant 0 : i32
    return %c0_i32, %c0_i32_0 : i32, i32
  }
  func.func @transform_2(%arg0: i32) -> (i32, i32) {
    %c0_i32 = arith.constant 0 : i32
    %c0_i32_0 = arith.constant 0 : i32
    %c0_i32_1 = arith.constant 0 : i32
    return %c0_i32, %c0_i32_0 : i32, i32
  }
  func.func @transform_3(%arg0: i32) -> (i32, i32) {
    %c0_i32 = arith.constant 0 : i32
    %c0_i32_0 = arith.constant 0 : i32
    return %c0_i32, %arg0 : i32, i32
  }
}

</mosaic_0001>

<llo_original>
// kernel: net_forward.1
$region0: #{net_forward.1}
  #allocation0 [shape = 'u32[]', space=smem, size = 0x4, offset = 0x4, fixed_abs, tag = 'smem constant byte address 0x4 - core index']
  #allocation1 [shape = 'u32[144,128]{1,0:T(1,128)}', space=vmem, size = 0x12000, scoped, tag = 'internal scratch']
  #allocation2 [shape = 'f32[1,1]{1,0:T(1,128)S(6)}', space=smem, size = 0x200, scoped, tag = 'scoped memory for net_forward.1']
  %s0 = inlined_call_operand.vmem [shape: f32[1,128], index: 0, kind: input, shape index: {}]
  %s1 = inlined_call_operand.vmem [shape: f32[32,3], index: 1, kind: input, shape index: {}]
  %s2 = inlined_call_operand.<no memory space> [shape: f32[1,1], index: 2, kind: input, shape index: {}]
  %s3 = inlined_call_operand.vmem [shape: f32[1,128], index: 3, kind: output, shape index: {}]
  %s4 = sld [smem:[#allocation0]]
  $region22: #{net_forward.1} parent=0
    _
  %s6 = ssub.s32 1, %s4
  %s7 = scalar_select 0, %s6, %s4
  %8 = sst [smem:[#allocation2]] %s2
  // Predicated region
  $region2: #{net_forward.1} parent=0 // pred_check
    _
  $region3: #{net_forward.1} parent=0 // pred_check_branch
    %10 = sbr.rel (0) target = $region5
  $region4: #{net_forward.1} parent=0 // pred_region
    _
  $region5: #{net_forward.1} parent=0 // pred_fallthru
    _
  // Predicated region
  $region6: #{net_forward.1} parent=0 // pred_check
    _
  $region7: #{net_forward.1} parent=0 // pred_check_branch
    %12 = sbr.rel (0) target = $region9
  $region8: #{net_forward.1} parent=0 // pred_region
    _
  $region9: #{net_forward.1} parent=0 // pred_fallthru
    _
  // Predicated region
  $region10: #{net_forward.1} parent=0 // pred_check
    _
  $region11: #{net_forward.1} parent=0 // pred_check_branch
    %14 = sbr.rel (0) target = $region13
  $region12: #{net_forward.1} parent=0 // pred_region
    _
  $region13: #{net_forward.1} parent=0 // pred_fallthru
    _
  %v15 = vld [vmem:[%s0] sm:$0x1]
  %v16 = vld [vmem:[%s1] sm:$0xff]
  %v17 = vld [vmem:[%s1 + $0x8] sm:$0xff]
  %v18 = vld [vmem:[%s1 + $0x10] sm:$0xff]
  %v19 = vld [vmem:[%s1 + $0x18] sm:$0xff]
  %21 = vset.pattern.permute.xlu0 0
  %22 = vperm.xlu0 %21, %v16
  %v23 = vpop.permute.xlu0 %22
  %26 = vset.pattern.permute.xlu0 0
  %27 = vperm.xlu0 %26, %v17
  %v28 = vpop.permute.xlu0 %27
  %31 = vset.pattern.permute.xlu0 0
  %32 = vperm.xlu0 %31, %v18
  %v33 = vpop.permute.xlu0 %32
  %36 = vset.pattern.permute.xlu0 0
  %37 = vperm.xlu0 %36, %v19
  %v38 = vpop.permute.xlu0 %37
  %v41 = vlaneseq
  %v42 = vshrl.u32 %v41, 7
  %v43 = vsub.s32 0, %v42
  %v44 = vrot.slane %v15, %v43
  %v46 = vmul.f32 %v23, %v44
  %v47 = vmul.f32 %v28, %v44
  %v48 = vmul.f32 %v33, %v44
  %v49 = vmul.f32 %v38, %v44
  %50 = vset.pattern.permute.xlu0 1
  %51 = vperm.xlu0 %50, %v16
  %v52 = vpop.permute.xlu0 %51
  %54 = vset.pattern.permute.xlu0 1
  %55 = vperm.xlu0 %54, %v17
  %v56 = vpop.permute.xlu0 %55
  %58 = vset.pattern.permute.xlu0 1
  %59 = vperm.xlu0 %58, %v18
  %v60 = vpop.permute.xlu0 %59
  %62 = vset.pattern.permute.xlu0 1
  %63 = vperm.xlu0 %62, %v19
  %v64 = vpop.permute.xlu0 %63
  %v66 = vadd.f32 %v46, %v52
  %v67 = vadd.f32 %v47, %v56
  %v68 = vadd.f32 %v48, %v60
  %v69 = vadd.f32 %v49, %v64
  %v70 = vmax.f32 %v66, 0.0
  %v71 = vmax.f32 %v67, 0.0
  %v72 = vmax.f32 %v68, 0.0
  %v73 = vmax.f32 %v69, 0.0
  %74 = vset.pattern.permute.xlu0 2
  %75 = vperm.xlu0 %74, %v16
  %v76 = vpop.permute.xlu0 %75
  %78 = vset.pattern.permute.xlu0 2
  %79 = vperm.xlu0 %78, %v17
  %v80 = vpop.permute.xlu0 %79
  %82 = vset.pattern.permute.xlu0 2
  %83 = vperm.xlu0 %82, %v18
  %v84 = vpop.permute.xlu0 %83
  %86 = vset.pattern.permute.xlu0 2
  %87 = vperm.xlu0 %86, %v19
  %v88 = vpop.permute.xlu0 %87
  %v90 = vmul.f32 %v70, %v76
  %v91 = vmul.f32 %v71, %v80
  %v92 = vmul.f32 %v72, %v84
  %v93 = vmul.f32 %v73, %v88
  %v94 = vadd.f32 %v90, %v91
  %v95 = vadd.f32 %v94, %v92
  %v96 = vadd.f32 %v95, %v93
  %v97 = vrot.slane %v96, 4
  %v98 = vadd.f32 %v96, %v97
  %v99 = vrot.slane %v98, 2
  %v100 = vadd.f32 %v98, %v99
  %v101 = vrot.slane %v100, 1
  %v102 = vadd.f32 %v100, %v101
  %s103 = sld [smem:[#allocation2]]
  %v104 = vstv %s103
  %v105 = vadd.f32 %v102, %v104
  %106 = vst [vmem:[%s3] sm:$0x1] %v105
  // Predicated region
  $region14: #{net_forward.1} parent=0 // pred_check
    _
  $region15: #{net_forward.1} parent=0 // pred_check_branch
    %108 = sbr.rel (0) target = $region17
  $region16: #{net_forward.1} parent=0 // pred_region
    _
  $region17: #{net_forward.1} parent=0 // pred_fallthru
    _
  // Predicated region
  $region18: #{net_forward.1} parent=0 // pred_check
    _
  $region19: #{net_forward.1} parent=0 // pred_check_branch
    %110 = sbr.rel (0) target = $region21
  $region20: #{net_forward.1} parent=0 // pred_region
    _
  $region21: #{net_forward.1} parent=0 // pred_fallthru
    _

</llo_original>
